<compile_context>
chip_gen: v6e
topology: v6e:2x2x1
jax: 0.10.0
libtpu: 0.0.40
codegen_flags: <defaults>
</compile_context>

<pallas_src>
import jax
import jax.numpy as jnp
from jax.experimental import pallas as pl
from jax.experimental.pallas import tpu as pltpu


# --------------------------------------------------------------------------
# Pallas kernels
# --------------------------------------------------------------------------

def _compose4x4_kernel(a_ref, b_ref, o_ref):
    # Batched 4x4 compose on the VPU: o[m] = a[m] @ b[m], unrolled over the
    # contraction index with broadcast multiplies (no MXU, no per-batch grid).
    a = a_ref[...]                                  # (M, 4, 4)
    b = b_ref[...]                                  # (M, 4, 4)
    acc = a[:, :, 0:1] * b[:, 0:1, :]
    for j in range(1, 4):
        acc = acc + a[:, :, j:j + 1] * b[:, j:j + 1, :]
    o_ref[...] = acc


def compose4x4(a, b):
    """Batched rigid-transform composition C[m] = A[m] @ B[m].  a, b: (M,4,4)."""
    M = a.shape[0]
    return pl.pallas_call(
        _compose4x4_kernel,
        out_shape=jax.ShapeDtypeStruct((M, 4, 4), jnp.float32),
        grid=(1,),
        in_specs=[pl.BlockSpec((M, 4, 4), lambda i: (0, 0, 0)),
                  pl.BlockSpec((M, 4, 4), lambda i: (0, 0, 0))],
        out_specs=pl.BlockSpec((M, 4, 4), lambda i: (0, 0, 0)),
    )(a.astype(jnp.float32), b.astype(jnp.float32))


def _apply4x4_pair_kernel(t_ref, pts_ref, oa_ref, ob_ref):
    # One camera per grid step (grid index == camera index; t_ref is untiled
    # SMEM so we index it with program_id -- keep grid=(M,) if this changes).
    b = pl.program_id(0)
    x = pts_ref[0, 0:1, :]                          # (1, N)
    y = pts_ref[0, 1:2, :]
    z = pts_ref[0, 2:3, :]
    for out_ref, base in ((oa_ref, 0), (ob_ref, 12)):
        for r in range(3):
            c0 = t_ref[b, base + 4 * r + 0]
            c1 = t_ref[b, base + 4 * r + 1]
            c2 = t_ref[b, base + 4 * r + 2]
            c3 = t_ref[b, base + 4 * r + 3]
            out_ref[0, r:r + 1, :] = c0 * x + c1 * y + c2 * z + c3


def apply_4x4_pair(t_params, pts_cf):
    """Apply two rigid transforms to one point cloud in a single pass.

    t_params: (M, 24) f32 -- two row-major 3x4 transforms per camera (SMEM).
    pts_cf:   (M, 3, N) f32 channels-first points (N on lanes).
    returns:  two (M, 3, N) arrays (transform A, transform B).
    """
    M, _, N = pts_cf.shape
    return pl.pallas_call(
        _apply4x4_pair_kernel,
        out_shape=(jax.ShapeDtypeStruct((M, 3, N), jnp.float32),
                   jax.ShapeDtypeStruct((M, 3, N), jnp.float32)),
        grid=(M,),
        in_specs=[pl.BlockSpec(memory_space=pltpu.MemorySpace.SMEM),
                  pl.BlockSpec((1, 3, N), lambda i: (i, 0, 0))],
        out_specs=(pl.BlockSpec((1, 3, N), lambda i: (i, 0, 0)),
                   pl.BlockSpec((1, 3, N), lambda i: (i, 0, 0))),
        compiler_params=pltpu.CompilerParams(
            dimension_semantics=("parallel",)),
    )(t_params.astype(jnp.float32), pts_cf.astype(jnp.float32))


def _make_zbuf_unproject_kernel(H, W):
    Hf, Wf = float(H), float(W)

    def kernel(params_ref, u_ref, v_ref, pts_ref,
               depth_ref, valid_ref, xyz0_ref):
        b = pl.program_id(0)
        fx = params_ref[b, 0]
        fy = params_ref[b, 1]
        x0 = params_ref[b, 2]
        y0 = params_ref[b, 3]

        # ---- z-buffer: one-hot min over the sparse points (sublane reduce,
        #      lane-dense (1, P) result) -------------------------------------
        x = pts_ref[0, :, 0:1]                      # (N, 1)
        y = pts_ref[0, :, 1:2]
        z = pts_ref[0, :, 2:3]
        EPS = 1e-4
        inv_z = 1.0 / jnp.maximum(z, EPS)
        u = jnp.clip(fx * x * inv_z + x0, -1e6, 1e6)
        v = jnp.clip(fy * y * inv_z + y0, -1e6, 1e6)
        # round-half-up instead of round-half-even (differs only at exact ties)
        px = jnp.floor(u + 0.5)
        py = jnp.floor(v + 0.5)
        valid_pt = ((px >= 0.0) & (px < Wf) &
                    (py >= 0.0) & (py < Hf) & (z > EPS))
        flat = py * Wf + px                         # (N, 1), integral floats

        ug = u_ref[...]                             # (1, P)
        vg = v_ref[...]                             # (1, P)
        pix_idx = vg * Wf + ug                      # (1, P) == 0..P-1

        hit = (flat == pix_idx) & valid_pt          # (N, P)
        zb = jnp.where(hit, z, 100.0)               # z broadcasts (N,1)->(N,P)
        depth = jnp.min(zb, axis=0, keepdims=True)  # (1, P)
        depth_ref[0] = depth
        valid_ref[0] = jnp.where(depth < 100.0, 1.0, 0.0)

        # ---- fused depth2pointcloud + apply_4x4(camX0_T_camX, .) ----------
        xc = (ug - x0) * depth * (1.0 / fx)
        yc = (vg - y0) * depth * (1.0 / fy)
        zc = depth
        for r in range(3):
            t0 = params_ref[b, 4 + 4 * r + 0]
            t1 = params_ref[b, 4 + 4 * r + 1]
            t2 = params_ref[b, 4 + 4 * r + 2]
            t3 = params_ref[b, 4 + 4 * r + 3]
            xyz0_ref[0, r:r + 1, :] = t0 * xc + t1 * yc + t2 * zc + t3
    return kernel


def zbuffer_unproject_to_camX0(params, u_grid, v_grid, xyz, H, W):
    """Fused create_depth_image + valid + depth2pointcloud + apply_4x4.

    params: (M, 16) = [fx, fy, x0, y0, camX0_T_camX[:3,:4] row-major]  (SMEM)
    u_grid, v_grid: (1, H*W) pixel coordinate planes (shared across cameras)
    xyz:    (M, N, 3) sparse points in camX frame
    returns: depth (M,1,P) with 100.0 holes, valid (M,1,P) in {0,1},
             dense camX0-frame points channels-first (M,3,P).
    """
    M, N, _ = xyz.shape
    P = H * W
    return pl.pallas_call(
        _make_zbuf_unproject_kernel(H, W),
        out_shape=(jax.ShapeDtypeStruct((M, 1, P), jnp.float32),
                   jax.ShapeDtypeStruct((M, 1, P), jnp.float32),
                   jax.ShapeDtypeStruct((M, 3, P), jnp.float32)),
        grid=(M,),
        in_specs=[pl.BlockSpec(memory_space=pltpu.MemorySpace.SMEM),
                  pl.BlockSpec((1, P), lambda i: (0, 0)),
                  pl.BlockSpec((1, P), lambda i: (0, 0)),
                  pl.BlockSpec((1, N, 3), lambda i: (i, 0, 0))],
        out_specs=(pl.BlockSpec((1, 1, P), lambda i: (i, 0, 0)),
                   pl.BlockSpec((1, 1, P), lambda i: (i, 0, 0)),
                   pl.BlockSpec((1, 3, P), lambda i: (i, 0, 0))),
        compiler_params=pltpu.CompilerParams(
            dimension_semantics=("parallel",)),
    )(params.astype(jnp.float32), u_grid, v_grid, xyz.astype(jnp.float32))


def _mask_refine_kernel(inv_pad_ref, o_ref):
    # faithful to:  obj_mask = 1 - F.conv2d(1 - mask, ones(3,3), padding=1).clamp(0,1)
    #               obj_mask[obj_mask > 0] = 1
    # Separable 3x3 box sum: 3 sublane-shift adds then 3 lane-shift adds.
    mp = inv_pad_ref[0]                             # (H+2, W+2)
    H = mp.shape[0] - 2
    W = mp.shape[1] - 2
    col = mp[0:H, :] + mp[1:H + 1, :] + mp[2:H + 2, :]        # (H, W+2)
    acc = col[:, 0:W] + col[:, 1:W + 1] + col[:, 2:W + 2]     # (H, W)
    er = 1.0 - jnp.clip(acc, 0.0, 1.0)
    o_ref[0] = jnp.where(er > 0.0, 1.0, er)


def refine_obj_masks(masks):
    """3x3 ones-conv mask clean-up, all frames/objects in ONE launch.
    masks: (Ntot, H, W) float32 in {0,1} -> (Ntot, H, W)."""
    Ntot, H, W = masks.shape
    inv_pad = jnp.pad(1.0 - masks.astype(jnp.float32),
                      ((0, 0), (1, 1), (1, 1)))
    return pl.pallas_call(
        _mask_refine_kernel,
        out_shape=jax.ShapeDtypeStruct((Ntot, H, W), jnp.float32),
        grid=(Ntot,),
        in_specs=[pl.BlockSpec((1, H + 2, W + 2), lambda i: (i, 0, 0))],
        out_specs=pl.BlockSpec((1, H, W), lambda i: (i, 0, 0)),
        compiler_params=pltpu.CompilerParams(
            dimension_semantics=("parallel",)),
    )(inv_pad)


def _make_voxelize_kernel(Z, Y, X, centroid, bounds):
    cx, cy, cz = centroid
    scale = 1.0 / (2.0 * bounds)

    def kernel(vox_idx_ref, xyz_ref, occ_ref):
        x = xyz_ref[0, :, 0:1]                      # (Npts, 1)
        y = xyz_ref[0, :, 1:2]
        z = xyz_ref[0, :, 2:3]
        xi = jnp.floor((x - cx + bounds) * scale * float(X))
        yi = jnp.floor((y - cy + bounds) * scale * float(Y))
        zi = jnp.floor((z - cz + bounds) * scale * float(Z))
        valid = ((xi >= 0.0) & (xi < float(X)) &
                 (yi >= 0.0) & (yi < float(Y)) &
                 (zi >= 0.0) & (zi < float(Z)))
        flat = zi * float(Y * X) + yi * float(X) + xi          # (Npts, 1)
        vox_idx = vox_idx_ref[...]                              # (1, V)
        hit = (flat == vox_idx) & valid                         # (Npts, V)
        occ_ref[0] = jnp.max(jnp.where(hit, 1.0, 0.0),
                             axis=0, keepdims=True)             # (1, V)
    return kernel


def voxelize_xyz(xyz, scene_centroid, Z, Y, X, bounds=4.0):
    """vox_util.voxelize_xyz (simplified fixed-bounds grid) as a one-hot max.
    xyz: (B, Npts, 3) -> (B, 1, Z, Y, X) occupancy."""
    B, Npts, _ = xyz.shape
    V = Z * Y * X
    vox_idx = jnp.arange(V, dtype=jnp.float32)[None, :]          # (1, V)
    occ = pl.pallas_call(
        _make_voxelize_kernel(Z, Y, X, tuple(scene_centroid), bounds),
        out_shape=jax.ShapeDtypeStruct((B, 1, V), jnp.float32),
        grid=(B,),
        in_specs=[pl.BlockSpec((1, V), lambda i: (0, 0)),
                  pl.BlockSpec((1, Npts, 3), lambda i: (i, 0, 0))],
        out_specs=pl.BlockSpec((1, 1, V), lambda i: (i, 0, 0)),
        compiler_params=pltpu.CompilerParams(
            dimension_semantics=("parallel",)),
    )(vox_idx, xyz.astype(jnp.float32))
    return occ.reshape(B, 1, Z, Y, X)


# --------------------------------------------------------------------------
# Plain-JAX glue (tiny parameter math, reshapes)
# --------------------------------------------------------------------------

def safe_inverse(T):
    """utils.geom.safe_inverse for rigid 4x4: [R t; 0 1]^-1 = [R^T -R^T t; 0 1]."""
    R = T[:, :3, :3]
    t = T[:, :3, 3:]
    Rt = jnp.swapaxes(R, 1, 2)
    tinv = -jnp.matmul(Rt, t)
    top = jnp.concatenate([Rt, tinv], axis=2)
    bot = jnp.tile(jnp.array([[[0.0, 0.0, 0.0, 1.0]]], jnp.float32),
                   (T.shape[0], 1, 1))
    return jnp.concatenate([top, bot], axis=1)


def back2color(rgb):
    """utils.improc.back2color: [-0.5, 0.5] float -> uint8."""
    return jnp.clip((rgb + 0.5) * 255.0, 0.0, 255.0).astype(jnp.uint8)


def _rows3x4(T):
    """Row-major flattened top 3x4 block of a (M,4,4) transform -> (M, 12)."""
    return T[:, :3, :4].reshape(T.shape[0], 12)


# --------------------------------------------------------------------------
# EvalModel forward (prepare_common_tensors + run_train tensor compute)
# --------------------------------------------------------------------------

def eval_model_forward(feed):
    B = feed['set_batch_size']
    S = feed['set_seqlen']
    H = feed['H']
    W = feed['W']
    P = H * W
    M = B * S

    pack = lambda x: x.reshape((B * S,) + x.shape[2:])       # pack_seqdim
    unpack = lambda x: x.reshape((B, S) + x.shape[1:])       # unpack_seqdim

    pix_T_cams = feed['pix_T_cams_raw'].astype(jnp.float32)
    camRs_T_origin = feed['camR_T_origin_raw'].astype(jnp.float32)
    origin_T_camXs = feed['origin_T_camXs_raw'].astype(jnp.float32)
    xyz_camXs = feed['xyz_camXs_raw'].astype(jnp.float32)

    pix_ = pack(pix_T_cams)
    camRs_T_origin_ = pack(camRs_T_origin)
    origin_T_camRs_ = safe_inverse(camRs_T_origin_)
    origin_T_camRs = unpack(origin_T_camRs_)
    origin_T_camXs_ = pack(origin_T_camXs)

    # --- batched camera-chain composes (two Pallas launches total) ---
    camX0_T_origin = safe_inverse(origin_T_camXs[:, 0])          # (B,4,4)
    camR0_T_origin = safe_inverse(origin_T_camRs[:, 0])
    camX0_T_origin_rep_ = pack(jnp.repeat(camX0_T_origin[:, None], S, axis=1))
    camR0_T_origin_rep_ = pack(jnp.repeat(camR0_T_origin[:, None], S, axis=1))

    A1 = jnp.concatenate([camX0_T_origin_rep_,
                          camR0_T_origin_rep_,
                          safe_inverse(origin_T_camRs_)], axis=0)
    B1 = jnp.concatenate([origin_T_camXs_,
                          origin_T_camRs_,
                          origin_T_camXs_], axis=0)
    C1 = compose4x4(A1, B1)                                       # Pallas #1
    camX0s_T_camXs_ = C1[0:M]
    camR0s_T_camRs_ = C1[M:2 * M]
    camRs_T_camXs_ = C1[2 * M:3 * M]

    camX0s_T_camXs = unpack(camX0s_T_camXs_)
    camRs_T_camR0s = unpack(safe_inverse(camR0s_T_camRs_))
    camXs_T_camRs_ = safe_inverse(camRs_T_camXs_)
    camXs_T_camX0s_ = safe_inverse(camX0s_T_camXs_)

    A2 = jnp.concatenate([camXs_T_camRs_, pix_], axis=0)
    B2 = jnp.concatenate([camRs_T_origin_, camXs_T_camX0s_], axis=0)
    C2 = compose4x4(A2, B2)                                       # Pallas #2
    camXs_T_origin_ = C2[0:M]
    pixX_T_camX0s = unpack(C2[M:2 * M])

    # --- point-cloud transforms: both frames in one pass over the points ---
    xyz_camXs_ = pack(xyz_camXs)                                  # (M, N, 3)
    pts_cf = jnp.transpose(xyz_camXs_, (0, 2, 1))                 # (M, 3, N)
    t_pair = jnp.concatenate([_rows3x4(camRs_T_camXs_),
                              _rows3x4(camX0s_T_camXs_)], axis=1)  # (M, 24)
    xyzR_cf, xyzX0_cf = apply_4x4_pair(t_pair, pts_cf)            # Pallas #3
    xyz_camRs = unpack(jnp.transpose(xyzR_cf, (0, 2, 1)))
    xyz_camX0s = unpack(jnp.transpose(xyzX0_cf, (0, 2, 1)))

    rgb_camXs = feed['rgb_camXs'][:, :, :3].astype(jnp.float32)
    rgb_uint8 = back2color(rgb_camXs)

    # --- fused z-buffer depth + valid + unproject-to-camX0 (one launch) ---
    intr = jnp.stack([pix_[:, 0, 0], pix_[:, 1, 1],
                      pix_[:, 0, 2], pix_[:, 1, 2]], axis=-1)      # (M, 4)
    zparams = jnp.concatenate([intr, _rows3x4(camX0s_T_camXs_)],
                              axis=1)                              # (M, 16)
    u_grid = (jnp.arange(P) % W).astype(jnp.float32)[None, :]
    v_grid = (jnp.arange(P) // W).astype(jnp.float32)[None, :]
    depth_flat, valid_flat, dense_xyz_camX0_cf = zbuffer_unproject_to_camX0(
        zparams, u_grid, v_grid, xyz_camXs_, H, W)                 # Pallas #4
    depth_camXs_ = depth_flat.reshape(M, H, W)
    valid_camXs_ = valid_flat.reshape(M, H, W)
    dense_xyz_camX0s = unpack(jnp.transpose(dense_xyz_camX0_cf, (0, 2, 1)))
    dense_xyz_camX0s_mult = dense_xyz_camX0s.reshape(B, S * P, 3)

    # --- per-frame maskRCNN stage ---
    # TODO(synk): detectron2 DefaultPredictor / Visualizer / dataset catalogs
    # have no Pallas equivalent; synthetic predicted masks stand in and only
    # the tensor compute (3x3 ones-conv mask cleanup) is implemented.
    pred_masks = feed['pred_masks'].astype(jnp.float32)   # (S, Nobj, H, W)
    S_, Nobj = pred_masks.shape[0], pred_masks.shape[1]
    refined = refine_obj_masks(
        pred_masks.reshape(S_ * Nobj, H, W))                       # Pallas #5
    masklist_camXs_safe = refined.reshape(S_, Nobj, H, W)
    any_mask_camXs = jnp.max(masklist_camXs_safe, axis=1)          # (S, H, W)

    # --- run_train tensor compute ---
    # TODO(synk): Summ_writer logging and the mAP text-file dump in run_train
    # are host-side I/O with no tensor compute; omitted.
    scene_centroid = (0.0, 1.0, -1.0)
    VOX = feed['vox_dim']
    occ_memX0s_dense_scene = voxelize_xyz(
        dense_xyz_camX0s_mult, scene_centroid, VOX, VOX, VOX)      # Pallas #6

    total_loss = jnp.float32(0.0)
    results = dict(
        xyz_camRs=xyz_camRs,
        xyz_camX0s=xyz_camX0s,
        camRs_T_camR0s=camRs_T_camR0s,
        camXs_T_origin=unpack(camXs_T_origin_),
        depth_camXs=unpack(depth_camXs_),
        valid_camXs=unpack(valid_camXs_),
        dense_xyz_camX0s_mult=dense_xyz_camX0s_mult,
        masklist_camXs_safe=masklist_camXs_safe,
        any_mask_camXs=any_mask_camXs,
        occ_memX0s_dense_scene=occ_memX0s_dense_scene,
        pixX_T_camX0s=pixX_T_camX0s,
        rgb_uint8=rgb_uint8,
    )
    return total_loss, results


# --------------------------------------------------------------------------
# Deterministic synthetic inputs
# --------------------------------------------------------------------------

def make_rigid(key, M):
    k1, k2 = jax.random.split(key)
    A = jax.random.normal(k1, (M, 3, 3), jnp.float32)
    Q, _ = jnp.linalg.qr(A)
    det = jnp.linalg.det(Q)
    Q = Q * jnp.where(det < 0, -1.0, 1.0)[:, None, None]
    t = jax.random.normal(k2, (M, 3, 1), jnp.float32) * 0.5
    top = jnp.concatenate([Q, t], axis=2)
    bot = jnp.tile(jnp.array([[[0.0, 0.0, 0.0, 1.0]]], jnp.float32), (M, 1, 1))
    return jnp.concatenate([top, bot], axis=1)


if __name__ == "__main__":
    B, S, H, W = 2, 3, 16, 16
    NPTS, NOBJ, VOX = 256, 2, 8

    key = jax.random.PRNGKey(0)
    k0, k1, k2, k3, k4 = jax.random.split(key, 5)

    K = jnp.array([[float(W), 0.0, W / 2.0, 0.0],
                   [0.0, float(W), H / 2.0, 0.0],
                   [0.0, 0.0, 1.0, 0.0],
                   [0.0, 0.0, 0.0, 1.0]], jnp.float32)
    pix_T_cams_raw = jnp.tile(K[None, None], (B, S, 1, 1))

    xy = jax.random.uniform(k2, (B, S, NPTS, 2), minval=-2.0, maxval=2.0)
    z = jax.random.uniform(k2, (B, S, NPTS, 1), minval=1.0, maxval=6.0)
    xyz_camXs_raw = jnp.concatenate([xy, z], axis=-1).astype(jnp.float32)

    feed = {
        'set_batch_size': B,
        'set_seqlen': S,
        'H': H,
        'W': W,
        'vox_dim': VOX,
        'pix_T_cams_raw': pix_T_cams_raw,
        'camR_T_origin_raw': make_rigid(k0, B * S).reshape(B, S, 4, 4),
        'origin_T_camXs_raw': make_rigid(k1, B * S).reshape(B, S, 4, 4),
        'xyz_camXs_raw': xyz_camXs_raw,
        'rgb_camXs': jax.random.uniform(k3, (B, S, 3, H, W)) - 0.5,
        'pred_masks': (jax.random.uniform(k4, (S, NOBJ, H, W)) > 0.35
                       ).astype(jnp.float32),
    }

    total_loss, results = eval_model_forward(feed)
    jax.block_until_ready((total_loss, results))
    print("KERNEL_OK")
</pallas_src>

<mosaic_0001>
module attributes {stable_mosaic.version = 11 : i64} {
  func.func @_compose4x4_kernel(%arg0: i32, %arg1: memref<18x4x4xf32, #tpu.memory_space<vmem>>, %arg2: memref<18x4x4xf32, #tpu.memory_space<vmem>>, %arg3: memref<18x4x4xf32, #tpu.memory_space<vmem>>) attributes {dimension_semantics = [#tpu.dimension_semantics<arbitrary>], iteration_bounds = array<i64: 1>, scalar_prefetch = 0 : i64, scratch_operands = 0 : i64, tpu.core_type = #tpu.core_type<tc>, window_params = [{pipeline_mode = #tpu.pipeline_mode<synchronous>, transform_indices = @transform_0, window_bounds = array<i64: 18, 4, 4>}, {pipeline_mode = #tpu.pipeline_mode<synchronous>, transform_indices = @transform_1, window_bounds = array<i64: 18, 4, 4>}, {pipeline_mode = #tpu.pipeline_mode<synchronous>, transform_indices = @transform_2, window_bounds = array<i64: 18, 4, 4>}]} {
    %c0 = arith.constant 0 : index
    %c0_0 = arith.constant 0 : index
    %c0_1 = arith.constant 0 : index
    %0 = vector.load %arg1[%c0, %c0_0, %c0_1] : memref<18x4x4xf32, #tpu.memory_space<vmem>>, vector<18x4x4xf32>
    %c0_2 = arith.constant 0 : index
    %c0_3 = arith.constant 0 : index
    %c0_4 = arith.constant 0 : index
    %1 = vector.load %arg2[%c0_2, %c0_3, %c0_4] : memref<18x4x4xf32, #tpu.memory_space<vmem>>, vector<18x4x4xf32>
    %2 = vector.extract_strided_slice %0 {offsets = [0, 0, 0], sizes = [18, 4, 1], strides = [1, 1, 1]} : vector<18x4x4xf32> to vector<18x4x1xf32>
    %3 = vector.extract_strided_slice %1 {offsets = [0, 0, 0], sizes = [18, 1, 4], strides = [1, 1, 1]} : vector<18x4x4xf32> to vector<18x1x4xf32>
    %4 = vector.broadcast %2 : vector<18x4x1xf32> to vector<18x4x4xf32>
    %5 = vector.broadcast %3 : vector<18x1x4xf32> to vector<18x4x4xf32>
    %6 = arith.mulf %4, %5 : vector<18x4x4xf32>
    %7 = vector.extract_strided_slice %0 {offsets = [0, 0, 1], sizes = [18, 4, 1], strides = [1, 1, 1]} : vector<18x4x4xf32> to vector<18x4x1xf32>
    %8 = vector.extract_strided_slice %1 {offsets = [0, 1, 0], sizes = [18, 1, 4], strides = [1, 1, 1]} : vector<18x4x4xf32> to vector<18x1x4xf32>
    %9 = vector.broadcast %7 : vector<18x4x1xf32> to vector<18x4x4xf32>
    %10 = vector.broadcast %8 : vector<18x1x4xf32> to vector<18x4x4xf32>
    %11 = arith.mulf %9, %10 : vector<18x4x4xf32>
    %12 = arith.addf %6, %11 : vector<18x4x4xf32>
    %13 = vector.extract_strided_slice %0 {offsets = [0, 0, 2], sizes = [18, 4, 1], strides = [1, 1, 1]} : vector<18x4x4xf32> to vector<18x4x1xf32>
    %14 = vector.extract_strided_slice %1 {offsets = [0, 2, 0], sizes = [18, 1, 4], strides = [1, 1, 1]} : vector<18x4x4xf32> to vector<18x1x4xf32>
    %15 = vector.broadcast %13 : vector<18x4x1xf32> to vector<18x4x4xf32>
    %16 = vector.broadcast %14 : vector<18x1x4xf32> to vector<18x4x4xf32>
    %17 = arith.mulf %15, %16 : vector<18x4x4xf32>
    %18 = arith.addf %12, %17 : vector<18x4x4xf32>
    %19 = vector.extract_strided_slice %0 {offsets = [0, 0, 3], sizes = [18, 4, 1], strides = [1, 1, 1]} : vector<18x4x4xf32> to vector<18x4x1xf32>
    %20 = vector.extract_strided_slice %1 {offsets = [0, 3, 0], sizes = [18, 1, 4], strides = [1, 1, 1]} : vector<18x4x4xf32> to vector<18x1x4xf32>
    %21 = vector.broadcast %19 : vector<18x4x1xf32> to vector<18x4x4xf32>
    %22 = vector.broadcast %20 : vector<18x1x4xf32> to vector<18x4x4xf32>
    %23 = arith.mulf %21, %22 : vector<18x4x4xf32>
    %24 = arith.addf %18, %23 : vector<18x4x4xf32>
    %c0_5 = arith.constant 0 : index
    %c0_6 = arith.constant 0 : index
    %c0_7 = arith.constant 0 : index
    %25 = vector.load %arg3[%c0_5, %c0_6, %c0_7] : memref<18x4x4xf32, #tpu.memory_space<vmem>>, vector<18x4x4xf32>
    tpu.vector_store %arg3[%c0_5, %c0_6, %c0_7], %24 {strides = array<i32>} : memref<18x4x4xf32, #tpu.memory_space<vmem>>, vector<18x4x4xf32>,
    return
  }
  func.func @transform_0(%arg0: i32) -> (i32, i32, i32) {
    %c0_i32 = arith.constant 0 : i32
    %c0_i32_0 = arith.constant 0 : i32
    %c0_i32_1 = arith.constant 0 : i32
    %c0_i32_2 = arith.constant 0 : i32
    return %c0_i32, %c0_i32_0, %c0_i32_1 : i32, i32, i32
  }
  func.func @transform_1(%arg0: i32) -> (i32, i32, i32) {
    %c0_i32 = arith.constant 0 : i32
    %c0_i32_0 = arith.constant 0 : i32
    %c0_i32_1 = arith.constant 0 : i32
    %c0_i32_2 = arith.constant 0 : i32
    return %c0_i32, %c0_i32_0, %c0_i32_1 : i32, i32, i32
  }
  func.func @transform_2(%arg0: i32) -> (i32, i32, i32) {
    %c0_i32 = arith.constant 0 : i32
    %c0_i32_0 = arith.constant 0 : i32
    %c0_i32_1 = arith.constant 0 : i32
    %c0_i32_2 = arith.constant 0 : i32
    return %c0_i32, %c0_i32_0, %c0_i32_1 : i32, i32, i32
  }
}

</mosaic_0001>

<llo_original>
// kernel: tpu_custom_call.1
$region0: #{tpu_custom_call.1}
  #allocation0 [shape = 'u32[]', space=smem, size = 0x4, offset = 0x4, fixed_abs, tag = 'smem constant byte address 0x4 - core index']
  #allocation1 [shape = 'u32[144,128]{1,0:T(1,128)}', space=vmem, size = 0x12000, scoped, tag = 'internal scratch']
  %s0 = inlined_call_operand.vmem [shape: f32[18,4,4], index: 0, kind: input, shape index: {}]
  %s1 = inlined_call_operand.vmem [shape: f32[18,4,4], index: 1, kind: input, shape index: {}]
  %s2 = inlined_call_operand.vmem [shape: f32[18,4,4], index: 2, kind: output, shape index: {}]
  %s3 = sld [smem:[#allocation0]]
  $region18: #{tpu_custom_call.1} parent=0
    _
  %s5 = ssub.s32 1, %s3
  %s6 = scalar_select 0, %s5, %s3
  // Predicated region
  $region2: #{tpu_custom_call.1} parent=0 // pred_check
    _
  $region3: #{tpu_custom_call.1} parent=0 // pred_check_branch
    %8 = sbr.rel (0) target = $region5
  $region4: #{tpu_custom_call.1} parent=0 // pred_region
    _
  $region5: #{tpu_custom_call.1} parent=0 // pred_fallthru
    _
  // Predicated region
  $region6: #{tpu_custom_call.1} parent=0 // pred_check
    _
  $region7: #{tpu_custom_call.1} parent=0 // pred_check_branch
    %10 = sbr.rel (0) target = $region9
  $region8: #{tpu_custom_call.1} parent=0 // pred_region
    _
  $region9: #{tpu_custom_call.1} parent=0 // pred_fallthru
    _
  %v11 = vld [vmem:[%s0] sm:$0xf]
  %v12 = vld [vmem:[%s0 + $0x4] sm:$0xf]
  %v13 = vld [vmem:[%s0 + $0x8] sm:$0xf]
  %v14 = vld [vmem:[%s0 + $0xc] sm:$0xf]
  %v15 = vld [vmem:[%s0 + $0x10] sm:$0xf]
  %v16 = vld [vmem:[%s0 + $0x14] sm:$0xf]
  %v17 = vld [vmem:[%s0 + $0x18] sm:$0xf]
  %v18 = vld [vmem:[%s0 + $0x1c] sm:$0xf]
  %v19 = vld [vmem:[%s0 + $0x20] sm:$0xf]
  %v20 = vld [vmem:[%s0 + $0x24] sm:$0xf]
  %v21 = vld [vmem:[%s0 + $0x28] sm:$0xf]
  %v22 = vld [vmem:[%s0 + $0x2c] sm:$0xf]
  %v23 = vld [vmem:[%s0 + $0x30] sm:$0xf]
  %v24 = vld [vmem:[%s0 + $0x34] sm:$0xf]
  %v25 = vld [vmem:[%s0 + $0x38] sm:$0xf]
  %v26 = vld [vmem:[%s0 + $0x3c] sm:$0xf]
  %v27 = vld [vmem:[%s0 + $0x40] sm:$0xf]
  %v28 = vld [vmem:[%s0 + $0x44] sm:$0xf]
  %v29 = vld [vmem:[%s1] sm:$0xf]
  %v30 = vld [vmem:[%s1 + $0x4] sm:$0xf]
  %v31 = vld [vmem:[%s1 + $0x8] sm:$0xf]
  %v32 = vld [vmem:[%s1 + $0xc] sm:$0xf]
  %v33 = vld [vmem:[%s1 + $0x10] sm:$0xf]
  %v34 = vld [vmem:[%s1 + $0x14] sm:$0xf]
  %v35 = vld [vmem:[%s1 + $0x18] sm:$0xf]
  %v36 = vld [vmem:[%s1 + $0x1c] sm:$0xf]
  %v37 = vld [vmem:[%s1 + $0x20] sm:$0xf]
  %v38 = vld [vmem:[%s1 + $0x24] sm:$0xf]
  %v39 = vld [vmem:[%s1 + $0x28] sm:$0xf]
  %v40 = vld [vmem:[%s1 + $0x2c] sm:$0xf]
  %v41 = vld [vmem:[%s1 + $0x30] sm:$0xf]
  %v42 = vld [vmem:[%s1 + $0x34] sm:$0xf]
  %v43 = vld [vmem:[%s1 + $0x38] sm:$0xf]
  %v44 = vld [vmem:[%s1 + $0x3c] sm:$0xf]
  %v45 = vld [vmem:[%s1 + $0x40] sm:$0xf]
  %v46 = vld [vmem:[%s1 + $0x44] sm:$0xf]
  %48 = vset.pattern.permute.xlu0 0
  %49 = vperm.xlu0 %48, %v11
  %v50 = vpop.permute.xlu0 %49
  %53 = vset.pattern.permute.xlu0 0
  %54 = vperm.xlu0 %53, %v12
  %v55 = vpop.permute.xlu0 %54
  %58 = vset.pattern.permute.xlu0 0
  %59 = vperm.xlu0 %58, %v13
  %v60 = vpop.permute.xlu0 %59
  %63 = vset.pattern.permute.xlu0 0
  %64 = vperm.xlu0 %63, %v14
  %v65 = vpop.permute.xlu0 %64
  %68 = vset.pattern.permute.xlu0 0
  %69 = vperm.xlu0 %68, %v15
  %v70 = vpop.permute.xlu0 %69
  %73 = vset.pattern.permute.xlu0 0
  %74 = vperm.xlu0 %73, %v16
  %v75 = vpop.permute.xlu0 %74
  %78 = vset.pattern.permute.xlu0 0
  %79 = vperm.xlu0 %78, %v17
  %v80 = vpop.permute.xlu0 %79
  %83 = vset.pattern.permute.xlu0 0
  %84 = vperm.xlu0 %83, %v18
  %v85 = vpop.permute.xlu0 %84
  %88 = vset.pattern.permute.xlu0 0
  %89 = vperm.xlu0 %88, %v19
  %v90 = vpop.permute.xlu0 %89
  %93 = vset.pattern.permute.xlu0 0
  %94 = vperm.xlu0 %93, %v20
  %v95 = vpop.permute.xlu0 %94
  %98 = vset.pattern.permute.xlu0 0
  %99 = vperm.xlu0 %98, %v21
  %v100 = vpop.permute.xlu0 %99
  %103 = vset.pattern.permute.xlu0 0
  %104 = vperm.xlu0 %103, %v22
  %v105 = vpop.permute.xlu0 %104
  %108 = vset.pattern.permute.xlu0 0
  %109 = vperm.xlu0 %108, %v23
  %v110 = vpop.permute.xlu0 %109
  %113 = vset.pattern.permute.xlu0 0
  %114 = vperm.xlu0 %113, %v24
  %v115 = vpop.permute.xlu0 %114
  %118 = vset.pattern.permute.xlu0 0
  %119 = vperm.xlu0 %118, %v25
  %v120 = vpop.permute.xlu0 %119
  %123 = vset.pattern.permute.xlu0 0
  %124 = vperm.xlu0 %123, %v26
  %v125 = vpop.permute.xlu0 %124
  %128 = vset.pattern.permute.xlu0 0
  %129 = vperm.xlu0 %128, %v27
  %v130 = vpop.permute.xlu0 %129
  %133 = vset.pattern.permute.xlu0 0
  %134 = vperm.xlu0 %133, %v28
  %v135 = vpop.permute.xlu0 %134
  %v137 = vlaneseq
  %v138 = vshrl.u32 %v137, 7
  %v139 = vsub.s32 0, %v138
  %v140 = vrot.slane %v29, %v139
  %v141 = vlaneseq
  %v142 = vshrl.u32 %v141, 7
  %v143 = vsub.s32 0, %v142
  %v144 = vrot.slane %v30, %v143
  %v145 = vlaneseq
  %v146 = vshrl.u32 %v145, 7
  %v147 = vsub.s32 0, %v146
  %v148 = vrot.slane %v31, %v147
  %v149 = vlaneseq
  %v150 = vshrl.u32 %v149, 7
  %v151 = vsub.s32 0, %v150
  %v152 = vrot.slane %v32, %v151
  %v153 = vlaneseq
  %v154 = vshrl.u32 %v153, 7
  %v155 = vsub.s32 0, %v154
  %v156 = vrot.slane %v33, %v155
  %v157 = vlaneseq
  %v158 = vshrl.u32 %v157, 7
  %v159 = vsub.s32 0, %v158
  %v160 = vrot.slane %v34, %v159
  %v161 = vlaneseq
  %v162 = vshrl.u32 %v161, 7
  %v163 = vsub.s32 0, %v162
  %v164 = vrot.slane %v35, %v163
  %v165 = vlaneseq
  %v166 = vshrl.u32 %v165, 7
  %v167 = vsub.s32 0, %v166
  %v168 = vrot.slane %v36, %v167
  %v169 = vlaneseq
  %v170 = vshrl.u32 %v169, 7
  %v171 = vsub.s32 0, %v170
  %v172 = vrot.slane %v37, %v171
  %v173 = vlaneseq
  %v174 = vshrl.u32 %v173, 7
  %v175 = vsub.s32 0, %v174
  %v176 = vrot.slane %v38, %v175
  %v177 = vlaneseq
  %v178 = vshrl.u32 %v177, 7
  %v179 = vsub.s32 0, %v178
  %v180 = vrot.slane %v39, %v179
  %v181 = vlaneseq
  %v182 = vshrl.u32 %v181, 7
  %v183 = vsub.s32 0, %v182
  %v184 = vrot.slane %v40, %v183
  %v185 = vlaneseq
  %v186 = vshrl.u32 %v185, 7
  %v187 = vsub.s32 0, %v186
  %v188 = vrot.slane %v41, %v187
  %v189 = vlaneseq
  %v190 = vshrl.u32 %v189, 7
  %v191 = vsub.s32 0, %v190
  %v192 = vrot.slane %v42, %v191
  %v193 = vlaneseq
  %v194 = vshrl.u32 %v193, 7
  %v195 = vsub.s32 0, %v194
  %v196 = vrot.slane %v43, %v195
  %v197 = vlaneseq
  %v198 = vshrl.u32 %v197, 7
  %v199 = vsub.s32 0, %v198
  %v200 = vrot.slane %v44, %v199
  %v201 = vlaneseq
  %v202 = vshrl.u32 %v201, 7
  %v203 = vsub.s32 0, %v202
  %v204 = vrot.slane %v45, %v203
  %v205 = vlaneseq
  %v206 = vshrl.u32 %v205, 7
  %v207 = vsub.s32 0, %v206
  %v208 = vrot.slane %v46, %v207
  %v209 = vmul.f32 %v50, %v140
  %v210 = vmul.f32 %v55, %v144
  %v211 = vmul.f32 %v60, %v148
  %v212 = vmul.f32 %v65, %v152
  %v213 = vmul.f32 %v70, %v156
  %v214 = vmul.f32 %v75, %v160
  %v215 = vmul.f32 %v80, %v164
  %v216 = vmul.f32 %v85, %v168
  %v217 = vmul.f32 %v90, %v172
  %v218 = vmul.f32 %v95, %v176
  %v219 = vmul.f32 %v100, %v180
  %v220 = vmul.f32 %v105, %v184
  %v221 = vmul.f32 %v110, %v188
  %v222 = vmul.f32 %v115, %v192
  %v223 = vmul.f32 %v120, %v196
  %v224 = vmul.f32 %v125, %v200
  %v225 = vmul.f32 %v130, %v204
  %v226 = vmul.f32 %v135, %v208
  %227 = vset.pattern.permute.xlu0 1
  %228 = vperm.xlu0 %227, %v11
  %v229 = vpop.permute.xlu0 %228
  %231 = vset.pattern.permute.xlu0 1
  %232 = vperm.xlu0 %231, %v12
  %v233 = vpop.permute.xlu0 %232
  %235 = vset.pattern.permute.xlu0 1
  %236 = vperm.xlu0 %235, %v13
  %v237 = vpop.permute.xlu0 %236
  %239 = vset.pattern.permute.xlu0 1
  %240 = vperm.xlu0 %239, %v14
  %v241 = vpop.permute.xlu0 %240
  %243 = vset.pattern.permute.xlu0 1
  %244 = vperm.xlu0 %243, %v15
  %v245 = vpop.permute.xlu0 %244
  %247 = vset.pattern.permute.xlu0 1
  %248 = vperm.xlu0 %247, %v16
  %v249 = vpop.permute.xlu0 %248
  %251 = vset.pattern.permute.xlu0 1
  %252 = vperm.xlu0 %251, %v17
  %v253 = vpop.permute.xlu0 %252
  %255 = vset.pattern.permute.xlu0 1
  %256 = vperm.xlu0 %255, %v18
  %v257 = vpop.permute.xlu0 %256
  %259 = vset.pattern.permute.xlu0 1
  %260 = vperm.xlu0 %259, %v19
  %v261 = vpop.permute.xlu0 %260
  %263 = vset.pattern.permute.xlu0 1
  %264 = vperm.xlu0 %263, %v20
  %v265 = vpop.permute.xlu0 %264
  %267 = vset.pattern.permute.xlu0 1
  %268 = vperm.xlu0 %267, %v21
  %v269 = vpop.permute.xlu0 %268
  %271 = vset.pattern.permute.xlu0 1
  %272 = vperm.xlu0 %271, %v22
  %v273 = vpop.permute.xlu0 %272
  %275 = vset.pattern.permute.xlu0 1
  %276 = vperm.xlu0 %275, %v23
  %v277 = vpop.permute.xlu0 %276
  %279 = vset.pattern.permute.xlu0 1
  %280 = vperm.xlu0 %279, %v24
  %v281 = vpop.permute.xlu0 %280
  %283 = vset.pattern.permute.xlu0 1
  %284 = vperm.xlu0 %283, %v25
  %v285 = vpop.permute.xlu0 %284
  %287 = vset.pattern.permute.xlu0 1
  %288 = vperm.xlu0 %287, %v26
  %v289 = vpop.permute.xlu0 %288
  %291 = vset.pattern.permute.xlu0 1
  %292 = vperm.xlu0 %291, %v27
  %v293 = vpop.permute.xlu0 %292
  %295 = vset.pattern.permute.xlu0 1
  %296 = vperm.xlu0 %295, %v28
  %v297 = vpop.permute.xlu0 %296
  %v299 = vlaneseq
  %v300 = vshrl.u32 %v299, 7
  %v301 = vsub.s32 1, %v300
  %v302 = vrot.slane %v29, %v301
  %v303 = vlaneseq
  %v304 = vshrl.u32 %v303, 7
  %v305 = vsub.s32 1, %v304
  %v306 = vrot.slane %v30, %v305
  %v307 = vlaneseq
  %v308 = vshrl.u32 %v307, 7
  %v309 = vsub.s32 1, %v308
  %v310 = vrot.slane %v31, %v309
  %v311 = vlaneseq
  %v312 = vshrl.u32 %v311, 7
  %v313 = vsub.s32 1, %v312
  %v314 = vrot.slane %v32, %v313
  %v315 = vlaneseq
  %v316 = vshrl.u32 %v315, 7
  %v317 = vsub.s32 1, %v316
  %v318 = vrot.slane %v33, %v317
  %v319 = vlaneseq
  %v320 = vshrl.u32 %v319, 7
  %v321 = vsub.s32 1, %v320
  %v322 = vrot.slane %v34, %v321
  %v323 = vlaneseq
  %v324 = vshrl.u32 %v323, 7
  %v325 = vsub.s32 1, %v324
  %v326 = vrot.slane %v35, %v325
  %v327 = vlaneseq
  %v328 = vshrl.u32 %v327, 7
  %v329 = vsub.s32 1, %v328
  %v330 = vrot.slane %v36, %v329
  %v331 = vlaneseq
  %v332 = vshrl.u32 %v331, 7
  %v333 = vsub.s32 1, %v332
  %v334 = vrot.slane %v37, %v333
  %v335 = vlaneseq
  %v336 = vshrl.u32 %v335, 7
  %v337 = vsub.s32 1, %v336
  %v338 = vrot.slane %v38, %v337
  %v339 = vlaneseq
  %v340 = vshrl.u32 %v339, 7
  %v341 = vsub.s32 1, %v340
  %v342 = vrot.slane %v39, %v341
  %v343 = vlaneseq
  %v344 = vshrl.u32 %v343, 7
  %v345 = vsub.s32 1, %v344
  %v346 = vrot.slane %v40, %v345
  %v347 = vlaneseq
  %v348 = vshrl.u32 %v347, 7
  %v349 = vsub.s32 1, %v348
  %v350 = vrot.slane %v41, %v349
  %v351 = vlaneseq
  %v352 = vshrl.u32 %v351, 7
  %v353 = vsub.s32 1, %v352
  %v354 = vrot.slane %v42, %v353
  %v355 = vlaneseq
  %v356 = vshrl.u32 %v355, 7
  %v357 = vsub.s32 1, %v356
  %v358 = vrot.slane %v43, %v357
  %v359 = vlaneseq
  %v360 = vshrl.u32 %v359, 7
  %v361 = vsub.s32 1, %v360
  %v362 = vrot.slane %v44, %v361
  %v363 = vlaneseq
  %v364 = vshrl.u32 %v363, 7
  %v365 = vsub.s32 1, %v364
  %v366 = vrot.slane %v45, %v365
  %v367 = vlaneseq
  %v368 = vshrl.u32 %v367, 7
  %v369 = vsub.s32 1, %v368
  %v370 = vrot.slane %v46, %v369
  %v371 = vmul.f32 %v229, %v302
  %v372 = vmul.f32 %v233, %v306
  %v373 = vmul.f32 %v237, %v310
  %v374 = vmul.f32 %v241, %v314
  %v375 = vmul.f32 %v245, %v318
  %v376 = vmul.f32 %v249, %v322
  %v377 = vmul.f32 %v253, %v326
  %v378 = vmul.f32 %v257, %v330
  %v379 = vmul.f32 %v261, %v334
  %v380 = vmul.f32 %v265, %v338
  %v381 = vmul.f32 %v269, %v342
  %v382 = vmul.f32 %v273, %v346
  %v383 = vmul.f32 %v277, %v350
  %v384 = vmul.f32 %v281, %v354
  %v385 = vmul.f32 %v285, %v358
  %v386 = vmul.f32 %v289, %v362
  %v387 = vmul.f32 %v293, %v366
  %v388 = vmul.f32 %v297, %v370
  %v389 = vadd.f32 %v209, %v371
  %v390 = vadd.f32 %v210, %v372
  %v391 = vadd.f32 %v211, %v373
  %v392 = vadd.f32 %v212, %v374
  %v393 = vadd.f32 %v213, %v375
  %v394 = vadd.f32 %v214, %v376
  %v395 = vadd.f32 %v215, %v377
  %v396 = vadd.f32 %v216, %v378
  %v397 = vadd.f32 %v217, %v379
  %v398 = vadd.f32 %v218, %v380
  %v399 = vadd.f32 %v219, %v381
  %v400 = vadd.f32 %v220, %v382
  %v401 = vadd.f32 %v221, %v383
  %v402 = vadd.f32 %v222, %v384
  %v403 = vadd.f32 %v223, %v385
  %v404 = vadd.f32 %v224, %v386
  %v405 = vadd.f32 %v225, %v387
  %v406 = vadd.f32 %v226, %v388
  %407 = vset.pattern.permute.xlu0 2
  %408 = vperm.xlu0 %407, %v11
  %v409 = vpop.permute.xlu0 %408
  %411 = vset.pattern.permute.xlu0 2
  %412 = vperm.xlu0 %411, %v12
  %v413 = vpop.permute.xlu0 %412
  %415 = vset.pattern.permute.xlu0 2
  %416 = vperm.xlu0 %415, %v13
  %v417 = vpop.permute.xlu0 %416
  %419 = vset.pattern.permute.xlu0 2
  %420 = vperm.xlu0 %419, %v14
  %v421 = vpop.permute.xlu0 %420
  %423 = vset.pattern.permute.xlu0 2
  %424 = vperm.xlu0 %423, %v15
  %v425 = vpop.permute.xlu0 %424
  %427 = vset.pattern.permute.xlu0 2
  %428 = vperm.xlu0 %427, %v16
  %v429 = vpop.permute.xlu0 %428
  %431 = vset.pattern.permute.xlu0 2
  %432 = vperm.xlu0 %431, %v17
  %v433 = vpop.permute.xlu0 %432
  %435 = vset.pattern.permute.xlu0 2
  %436 = vperm.xlu0 %435, %v18
  %v437 = vpop.permute.xlu0 %436
  %439 = vset.pattern.permute.xlu0 2
  %440 = vperm.xlu0 %439, %v19
  %v441 = vpop.permute.xlu0 %440
  %443 = vset.pattern.permute.xlu0 2
  %444 = vperm.xlu0 %443, %v20
  %v445 = vpop.permute.xlu0 %444
  %447 = vset.pattern.permute.xlu0 2
  %448 = vperm.xlu0 %447, %v21
  %v449 = vpop.permute.xlu0 %448
  %451 = vset.pattern.permute.xlu0 2
  %452 = vperm.xlu0 %451, %v22
  %v453 = vpop.permute.xlu0 %452
  %455 = vset.pattern.permute.xlu0 2
  %456 = vperm.xlu0 %455, %v23
  %v457 = vpop.permute.xlu0 %456
  %459 = vset.pattern.permute.xlu0 2
  %460 = vperm.xlu0 %459, %v24
  %v461 = vpop.permute.xlu0 %460
  %463 = vset.pattern.permute.xlu0 2
  %464 = vperm.xlu0 %463, %v25
  %v465 = vpop.permute.xlu0 %464
  %467 = vset.pattern.permute.xlu0 2
  %468 = vperm.xlu0 %467, %v26
  %v469 = vpop.permute.xlu0 %468
  %471 = vset.pattern.permute.xlu0 2
  %472 = vperm.xlu0 %471, %v27
  %v473 = vpop.permute.xlu0 %472
  %475 = vset.pattern.permute.xlu0 2
  %476 = vperm.xlu0 %475, %v28
  %v477 = vpop.permute.xlu0 %476
  %v479 = vlaneseq
  %v480 = vshrl.u32 %v479, 7
  %v481 = vsub.s32 2, %v480
  %v482 = vrot.slane %v29, %v481
  %v483 = vlaneseq
  %v484 = vshrl.u32 %v483, 7
  %v485 = vsub.s32 2, %v484
  %v486 = vrot.slane %v30, %v485
  %v487 = vlaneseq
  %v488 = vshrl.u32 %v487, 7
  %v489 = vsub.s32 2, %v488
  %v490 = vrot.slane %v31, %v489
  %v491 = vlaneseq
  %v492 = vshrl.u32 %v491, 7
  %v493 = vsub.s32 2, %v492
  %v494 = vrot.slane %v32, %v493
  %v495 = vlaneseq
  %v496 = vshrl.u32 %v495, 7
  %v497 = vsub.s32 2, %v496
  %v498 = vrot.slane %v33, %v497
  %v499 = vlaneseq
  %v500 = vshrl.u32 %v499, 7
  %v501 = vsub.s32 2, %v500
  %v502 = vrot.slane %v34, %v501
  %v503 = vlaneseq
  %v504 = vshrl.u32 %v503, 7
  %v505 = vsub.s32 2, %v504
  %v506 = vrot.slane %v35, %v505
  %v507 = vlaneseq
  %v508 = vshrl.u32 %v507, 7
  %v509 = vsub.s32 2, %v508
  %v510 = vrot.slane %v36, %v509
  %v511 = vlaneseq
  %v512 = vshrl.u32 %v511, 7
  %v513 = vsub.s32 2, %v512
  %v514 = vrot.slane %v37, %v513
  %v515 = vlaneseq
  %v516 = vshrl.u32 %v515, 7
  %v517 = vsub.s32 2, %v516
  %v518 = vrot.slane %v38, %v517
  %v519 = vlaneseq
  %v520 = vshrl.u32 %v519, 7
  %v521 = vsub.s32 2, %v520
  %v522 = vrot.slane %v39, %v521
  %v523 = vlaneseq
  %v524 = vshrl.u32 %v523, 7
  %v525 = vsub.s32 2, %v524
  %v526 = vrot.slane %v40, %v525
  %v527 = vlaneseq
  %v528 = vshrl.u32 %v527, 7
  %v529 = vsub.s32 2, %v528
  %v530 = vrot.slane %v41, %v529
  %v531 = vlaneseq
  %v532 = vshrl.u32 %v531, 7
  %v533 = vsub.s32 2, %v532
  %v534 = vrot.slane %v42, %v533
  %v535 = vlaneseq
  %v536 = vshrl.u32 %v535, 7
  %v537 = vsub.s32 2, %v536
  %v538 = vrot.slane %v43, %v537
  %v539 = vlaneseq
  %v540 = vshrl.u32 %v539, 7
  %v541 = vsub.s32 2, %v540
  %v542 = vrot.slane %v44, %v541
  %v543 = vlaneseq
  %v544 = vshrl.u32 %v543, 7
  %v545 = vsub.s32 2, %v544
  %v546 = vrot.slane %v45, %v545
  %v547 = vlaneseq
  %v548 = vshrl.u32 %v547, 7
  %v549 = vsub.s32 2, %v548
  %v550 = vrot.slane %v46, %v549
  %v551 = vmul.f32 %v409, %v482
  %v552 = vmul.f32 %v413, %v486
  %v553 = vmul.f32 %v417, %v490
  %v554 = vmul.f32 %v421, %v494
  %v555 = vmul.f32 %v425, %v498
  %v556 = vmul.f32 %v429, %v502
  %v557 = vmul.f32 %v433, %v506
  %v558 = vmul.f32 %v437, %v510
  %v559 = vmul.f32 %v441, %v514
  %v560 = vmul.f32 %v445, %v518
  %v561 = vmul.f32 %v449, %v522
  %v562 = vmul.f32 %v453, %v526
  %v563 = vmul.f32 %v457, %v530
  %v564 = vmul.f32 %v461, %v534
  %v565 = vmul.f32 %v465, %v538
  %v566 = vmul.f32 %v469, %v542
  %v567 = vmul.f32 %v473, %v546
  %v568 = vmul.f32 %v477, %v550
  %v569 = vadd.f32 %v389, %v551
  %v570 = vadd.f32 %v390, %v552
  %v571 = vadd.f32 %v391, %v553
  %v572 = vadd.f32 %v392, %v554
  %v573 = vadd.f32 %v393, %v555
  %v574 = vadd.f32 %v394, %v556
  %v575 = vadd.f32 %v395, %v557
  %v576 = vadd.f32 %v396, %v558
  %v577 = vadd.f32 %v397, %v559
  %v578 = vadd.f32 %v398, %v560
  %v579 = vadd.f32 %v399, %v561
  %v580 = vadd.f32 %v400, %v562
  %v581 = vadd.f32 %v401, %v563
  %v582 = vadd.f32 %v402, %v564
  %v583 = vadd.f32 %v403, %v565
  %v584 = vadd.f32 %v404, %v566
  %v585 = vadd.f32 %v405, %v567
  %v586 = vadd.f32 %v406, %v568
  %587 = vset.pattern.permute.xlu0 3
  %588 = vperm.xlu0 %587, %v11
  %v589 = vpop.permute.xlu0 %588
  %591 = vset.pattern.permute.xlu0 3
  %592 = vperm.xlu0 %591, %v12
  %v593 = vpop.permute.xlu0 %592
  %595 = vset.pattern.permute.xlu0 3
  %596 = vperm.xlu0 %595, %v13
  %v597 = vpop.permute.xlu0 %596
  %599 = vset.pattern.permute.xlu0 3
  %600 = vperm.xlu0 %599, %v14
  %v601 = vpop.permute.xlu0 %600
  %603 = vset.pattern.permute.xlu0 3
  %604 = vperm.xlu0 %603, %v15
  %v605 = vpop.permute.xlu0 %604
  %607 = vset.pattern.permute.xlu0 3
  %608 = vperm.xlu0 %607, %v16
  %v609 = vpop.permute.xlu0 %608
  %611 = vset.pattern.permute.xlu0 3
  %612 = vperm.xlu0 %611, %v17
  %v613 = vpop.permute.xlu0 %612
  %615 = vset.pattern.permute.xlu0 3
  %616 = vperm.xlu0 %615, %v18
  %v617 = vpop.permute.xlu0 %616
  %619 = vset.pattern.permute.xlu0 3
  %620 = vperm.xlu0 %619, %v19
  %v621 = vpop.permute.xlu0 %620
  %623 = vset.pattern.permute.xlu0 3
  %624 = vperm.xlu0 %623, %v20
  %v625 = vpop.permute.xlu0 %624
  %627 = vset.pattern.permute.xlu0 3
  %628 = vperm.xlu0 %627, %v21
  %v629 = vpop.permute.xlu0 %628
  %631 = vset.pattern.permute.xlu0 3
  %632 = vperm.xlu0 %631, %v22
  %v633 = vpop.permute.xlu0 %632
  %635 = vset.pattern.permute.xlu0 3
  %636 = vperm.xlu0 %635, %v23
  %v637 = vpop.permute.xlu0 %636
  %639 = vset.pattern.permute.xlu0 3
  %640 = vperm.xlu0 %639, %v24
  %v641 = vpop.permute.xlu0 %640
  %643 = vset.pattern.permute.xlu0 3
  %644 = vperm.xlu0 %643, %v25
  %v645 = vpop.permute.xlu0 %644
  %647 = vset.pattern.permute.xlu0 3
  %648 = vperm.xlu0 %647, %v26
  %v649 = vpop.permute.xlu0 %648
  %651 = vset.pattern.permute.xlu0 3
  %652 = vperm.xlu0 %651, %v27
  %v653 = vpop.permute.xlu0 %652
  %655 = vset.pattern.permute.xlu0 3
  %656 = vperm.xlu0 %655, %v28
  %v657 = vpop.permute.xlu0 %656
  %v659 = vlaneseq
  %v660 = vshrl.u32 %v659, 7
  %v661 = vsub.s32 3, %v660
  %v662 = vrot.slane %v29, %v661
  %v663 = vlaneseq
  %v664 = vshrl.u32 %v663, 7
  %v665 = vsub.s32 3, %v664
  %v666 = vrot.slane %v30, %v665
  %v667 = vlaneseq
  %v668 = vshrl.u32 %v667, 7
  %v669 = vsub.s32 3, %v668
  %v670 = vrot.slane %v31, %v669
  %v671 = vlaneseq
  %v672 = vshrl.u32 %v671, 7
  %v673 = vsub.s32 3, %v672
  %v674 = vrot.slane %v32, %v673
  %v675 = vlaneseq
  %v676 = vshrl.u32 %v675, 7
  %v677 = vsub.s32 3, %v676
  %v678 = vrot.slane %v33, %v677
  %v679 = vlaneseq
  %v680 = vshrl.u32 %v679, 7
  %v681 = vsub.s32 3, %v680
  %v682 = vrot.slane %v34, %v681
  %v683 = vlaneseq
  %v684 = vshrl.u32 %v683, 7
  %v685 = vsub.s32 3, %v684
  %v686 = vrot.slane %v35, %v685
  %v687 = vlaneseq
  %v688 = vshrl.u32 %v687, 7
  %v689 = vsub.s32 3, %v688
  %v690 = vrot.slane %v36, %v689
  %v691 = vlaneseq
  %v692 = vshrl.u32 %v691, 7
  %v693 = vsub.s32 3, %v692
  %v694 = vrot.slane %v37, %v693
  %v695 = vlaneseq
  %v696 = vshrl.u32 %v695, 7
  %v697 = vsub.s32 3, %v696
  %v698 = vrot.slane %v38, %v697
  %v699 = vlaneseq
  %v700 = vshrl.u32 %v699, 7
  %v701 = vsub.s32 3, %v700
  %v702 = vrot.slane %v39, %v701
  %v703 = vlaneseq
  %v704 = vshrl.u32 %v703, 7
  %v705 = vsub.s32 3, %v704
  %v706 = vrot.slane %v40, %v705
  %v707 = vlaneseq
  %v708 = vshrl.u32 %v707, 7
  %v709 = vsub.s32 3, %v708
  %v710 = vrot.slane %v41, %v709
  %v711 = vlaneseq
  %v712 = vshrl.u32 %v711, 7
  %v713 = vsub.s32 3, %v712
  %v714 = vrot.slane %v42, %v713
  %v715 = vlaneseq
  %v716 = vshrl.u32 %v715, 7
  %v717 = vsub.s32 3, %v716
  %v718 = vrot.slane %v43, %v717
  %v719 = vlaneseq
  %v720 = vshrl.u32 %v719, 7
  %v721 = vsub.s32 3, %v720
  %v722 = vrot.slane %v44, %v721
  %v723 = vlaneseq
  %v724 = vshrl.u32 %v723, 7
  %v725 = vsub.s32 3, %v724
  %v726 = vrot.slane %v45, %v725
  %v727 = vlaneseq
  %v728 = vshrl.u32 %v727, 7
  %v729 = vsub.s32 3, %v728
  %v730 = vrot.slane %v46, %v729
  %v731 = vmul.f32 %v589, %v662
  %v732 = vmul.f32 %v593, %v666
  %v733 = vmul.f32 %v597, %v670
  %v734 = vmul.f32 %v601, %v674
  %v735 = vmul.f32 %v605, %v678
  %v736 = vmul.f32 %v609, %v682
  %v737 = vmul.f32 %v613, %v686
  %v738 = vmul.f32 %v617, %v690
  %v739 = vmul.f32 %v621, %v694
  %v740 = vmul.f32 %v625, %v698
  %v741 = vmul.f32 %v629, %v702
  %v742 = vmul.f32 %v633, %v706
  %v743 = vmul.f32 %v637, %v710
  %v744 = vmul.f32 %v641, %v714
  %v745 = vmul.f32 %v645, %v718
  %v746 = vmul.f32 %v649, %v722
  %v747 = vmul.f32 %v653, %v726
  %v748 = vmul.f32 %v657, %v730
  %v749 = vadd.f32 %v569, %v731
  %v750 = vadd.f32 %v570, %v732
  %v751 = vadd.f32 %v571, %v733
  %v752 = vadd.f32 %v572, %v734
  %v753 = vadd.f32 %v573, %v735
  %v754 = vadd.f32 %v574, %v736
  %v755 = vadd.f32 %v575, %v737
  %v756 = vadd.f32 %v576, %v738
  %v757 = vadd.f32 %v577, %v739
  %v758 = vadd.f32 %v578, %v740
  %v759 = vadd.f32 %v579, %v741
  %v760 = vadd.f32 %v580, %v742
  %v761 = vadd.f32 %v581, %v743
  %v762 = vadd.f32 %v582, %v744
  %v763 = vadd.f32 %v583, %v745
  %v764 = vadd.f32 %v584, %v746
  %v765 = vadd.f32 %v585, %v747
  %v766 = vadd.f32 %v586, %v748
  %vm767 = vcmask 27648
  %768 = vst.msk [vmem:[%s2] sm:$0xf] %vm767, %v749
  %769 = vst.msk [vmem:[%s2 + $0x4] sm:$0xf] %vm767, %v750
  %770 = vst.msk [vmem:[%s2 + $0x8] sm:$0xf] %vm767, %v751
  %771 = vst.msk [vmem:[%s2 + $0xc] sm:$0xf] %vm767, %v752
  %772 = vst.msk [vmem:[%s2 + $0x10] sm:$0xf] %vm767, %v753
  %773 = vst.msk [vmem:[%s2 + $0x14] sm:$0xf] %vm767, %v754
  %774 = vst.msk [vmem:[%s2 + $0x18] sm:$0xf] %vm767, %v755
  %775 = vst.msk [vmem:[%s2 + $0x1c] sm:$0xf] %vm767, %v756
  %776 = vst.msk [vmem:[%s2 + $0x20] sm:$0xf] %vm767, %v757
  %777 = vst.msk [vmem:[%s2 + $0x24] sm:$0xf] %vm767, %v758
  %778 = vst.msk [vmem:[%s2 + $0x28] sm:$0xf] %vm767, %v759
  %779 = vst.msk [vmem:[%s2 + $0x2c] sm:$0xf] %vm767, %v760
  %780 = vst.msk [vmem:[%s2 + $0x30] sm:$0xf] %vm767, %v761
  %781 = vst.msk [vmem:[%s2 + $0x34] sm:$0xf] %vm767, %v762
  %782 = vst.msk [vmem:[%s2 + $0x38] sm:$0xf] %vm767, %v763
  %783 = vst.msk [vmem:[%s2 + $0x3c] sm:$0xf] %vm767, %v764
  %784 = vst.msk [vmem:[%s2 + $0x40] sm:$0xf] %vm767, %v765
  %785 = vst.msk [vmem:[%s2 + $0x44] sm:$0xf] %vm767, %v766
  // Predicated region
  $region10: #{tpu_custom_call.1} parent=0 // pred_check
    _
  $region11: #{tpu_custom_call.1} parent=0 // pred_check_branch
    %787 = sbr.rel (0) target = $region13
  $region12: #{tpu_custom_call.1} parent=0 // pred_region
    _
  $region13: #{tpu_custom_call.1} parent=0 // pred_fallthru
    _
  // Predicated region
  $region14: #{tpu_custom_call.1} parent=0 // pred_check
    _
  $region15: #{tpu_custom_call.1} parent=0 // pred_check_branch
    %789 = sbr.rel (0) target = $region17
  $region16: #{tpu_custom_call.1} parent=0 // pred_region
    _
  $region17: #{tpu_custom_call.1} parent=0 // pred_fallthru
    _

</llo_original>
